<compile_context>
chip_gen: v5e
topology: v5e:2x2
jax: 0.10.0
libtpu: 0.0.40
codegen_flags: <defaults>
</compile_context>

<pallas_src>
import jax
import jax.numpy as jnp
import numpy as np
from jax.experimental import pallas as pl
from jax.experimental.pallas import tpu as pltpu

_LANE = 128


# =============================================================================
# Residual: out = fn(x) + x        (the spec'd PyTorch `Residual` module)
# =============================================================================

def _residual_add_kernel(f_ref, x_ref, o_ref):
    o_ref[...] = f_ref[...] + x_ref[...]


def _sublane(dtype):
    # native sublane packing: 8 rows of 32-bit; sub-32-bit dtypes pack more rows
    return 8 * max(1, 4 // np.dtype(dtype).itemsize)


def _pick_tile_rows(rows, sublane, max_rows):
    """Largest sublane-aligned divisor of `rows` <= max_rows, preferring >=2
    (ideally an even number of) grid steps so both v7x TensorCores get work,
    but never shrinking the tile by more than 4x to obtain that parallelism."""
    units = rows // sublane
    max_units = max(1, max_rows // sublane)
    divs = []
    d = 1
    while d * d <= units:
        if units % d == 0:
            divs.extend({d, units // d})
        d += 1
    divs = sorted((c for c in divs if c <= max_units), reverse=True)
    c0 = divs[0]
    par = [c for c in divs if units // c >= 2 and c * 4 >= c0]
    if par:
        return max(par, key=lambda c: ((units // c) % 2 == 0, c)) * sublane
    return c0 * sublane


def pallas_residual_add(fn_out, x, *, max_rows_per_tile=2048):
    """Elementwise fn_out + x as a lane-dense tiled Pallas kernel."""
    shape, dtype = x.shape, x.dtype
    total = int(np.prod(shape)) if shape else 1
    sub = _sublane(dtype)
    chunk = sub * _LANE

    # Fast path (the common DDPM case): a FREE reshape to (rows, 128) --
    # no pad / flatten / trailing-slice HBM round-trips.
    # TODO(synk): handle ragged totals with a masked last tile (pltpu.store
    # mask) instead of the plain-XLA fallback below.
    if (fn_out.shape != shape or fn_out.dtype != dtype
            or total == 0 or total % chunk != 0):
        return fn_out + x

    rows = total // _LANE
    tile_rows = _pick_tile_rows(rows, sub, max_rows_per_tile)

    f2 = fn_out.reshape(rows, _LANE)
    x2 = x.reshape(rows, _LANE)

    out = pl.pallas_call(
        _residual_add_kernel,
        out_shape=jax.ShapeDtypeStruct((rows, _LANE), dtype),
        grid=(rows // tile_rows,),
        in_specs=[pl.BlockSpec((tile_rows, _LANE), lambda i: (i, 0)),
                  pl.BlockSpec((tile_rows, _LANE), lambda i: (i, 0))],
        out_specs=pl.BlockSpec((tile_rows, _LANE), lambda i: (i, 0)),
        compiler_params=pltpu.CompilerParams(
            dimension_semantics=("parallel",)),
        cost_estimate=pl.CostEstimate(
            flops=total, transcendentals=0,
            bytes_accessed=3 * total * np.dtype(dtype).itemsize),
    )(f2, x2)
    return out.reshape(shape)


class Residual:
    """forward(x, *args, **kwargs) = fn(x, *args, **kwargs) + x."""

    def __init__(self, fn):
        self.fn = fn

    def __call__(self, x, *args, **kwargs):
        return pallas_residual_add(self.fn(x, *args, **kwargs), x)


# =============================================================================
# Upsample: ConvTranspose2d(dim, dim, kernel=4, stride=2, padding=1)
# (kernel carried over from the previous round, rewritten per the perf review)
# =============================================================================

# Sub-pixel decomposition of ConvTranspose2d(k=4, s=2, p=1):
#   out[2m+ph, 2n+pw, co] = sum_taps x_padded[shifted, ci] * W[ci, co, kh, kw]
# (start offset into the 1-padded input, kernel tap index) per output parity:
_ROW_TAPS = {
    0: ((1, 1), (0, 3)),
    1: ((1, 2), (2, 0)),
}


def _tap_list(ph, pw):
    """(row offset, col offset, kh, kw) for the 4 taps of one output parity."""
    return [(sh, sw, kh, kw)
            for (sh, kh) in _ROW_TAPS[ph]
            for (sw, kw) in _ROW_TAPS[pw]]


def _upsample_kernel(x_ref, w_ref, b_ref, o_ref):
    # x_ref: (1, H+2, W+2, Cp) host-padded (halo + channels), input dtype
    # w_ref: (2, 2, 4, Cp, Cp) bf16 per-tap packed weights
    # b_ref: (1, Cp) f32 bias
    # o_ref: (1, H, 2, W, 2*Cp) in the input dtype (parity pw in the lane dim)
    Hp2, Wp2, Cp = x_ref.shape[1], x_ref.shape[2], x_ref.shape[3]
    H, W = Hp2 - 2, Wp2 - 2
    bias = b_ref[...]                                        # (1, Cp) f32

    # 9 distinct shifted views are shared by the 4 output parities; build each
    # bf16 MXU lhs once (trace-time cache), no K=4C concatenate copies.
    lhs_cache = {}

    def lhs(sh, sw):
        if (sh, sw) not in lhs_cache:
            lhs_cache[(sh, sw)] = (x_ref[0, sh:sh + H, sw:sw + W, :]
                                   .reshape(H * W, Cp).astype(jnp.bfloat16))
        return lhs_cache[(sh, sw)]

    for ph in range(2):
        for pw in range(2):
            taps = _tap_list(ph, pw)
            # 4 bf16 MXU dots accumulated in f32.
            acc = jnp.dot(lhs(taps[0][0], taps[0][1]), w_ref[ph, pw, 0],
                          preferred_element_type=jnp.float32)
            for t in range(1, 4):
                sh, sw = taps[t][0], taps[t][1]
                acc = acc + jnp.dot(lhs(sh, sw), w_ref[ph, pw, t],
                                    preferred_element_type=jnp.float32)
            acc = acc + bias
            # Lane-dense unmasked store: parity pw is a Cp-aligned lane slice.
            o_ref[0, :, ph:ph + 1, :, pw * Cp:(pw + 1) * Cp] = (
                acc.reshape(H, 1, W, Cp).astype(o_ref.dtype))


def _pack_weights(w_hw_io):
    """(4, 4, Cin, Cout) per-tap weights -> (2, 2, 4, Cin, Cout), _tap_list order."""
    return jnp.stack([
        jnp.stack([
            jnp.stack([w_hw_io[kh, kw] for (_, _, kh, kw) in _tap_list(ph, pw)],
                      axis=0)
            for pw in range(2)], axis=0)
        for ph in range(2)], axis=0)


def upsample_forward_nhwc(x_nhwc, weight, bias):
    """ConvTranspose2d(C, C, 4, 2, 1) on NHWC input; returns (N, 2H, 2W, C)."""
    N, H, W, C = x_nhwc.shape
    dtype = x_nhwc.dtype
    Cp = -(-C // _LANE) * _LANE            # lane-dense channel padding
    pc = Cp - C

    # Host-side halo + channel padding: the kernel reads the padded image
    # directly (no in-kernel scratch, border memsets, or staging copy).
    x = jnp.pad(x_nhwc, ((0, 0), (1, 1), (1, 1), (0, pc)))

    w = jnp.transpose(weight, (2, 3, 0, 1))                 # (kh, kw, Cin, Cout)
    if pc:
        w = jnp.pad(w, ((0, 0), (0, 0), (0, pc), (0, pc)))
    wp = _pack_weights(w).astype(jnp.bfloat16)              # (2, 2, 4, Cp, Cp)
    b = (jnp.pad(bias, (0, pc)) if pc else bias).astype(jnp.float32).reshape(1, Cp)

    itemsize = np.dtype(dtype).itemsize
    flops = 2 * N * H * W * 16 * Cp * Cp
    bytes_accessed = int(x.size * itemsize + wp.size * 2 + Cp * 4
                         + N * H * 2 * W * 2 * Cp * itemsize)

    # TODO(synk): for production DDPM shapes add a spatial row-block grid axis
    # with a 1-row halo (parallel alongside batch) and single-buffer the
    # constant weight block (pl.Buffered(1)) to bound VMEM on v7x / v5e.
    out = pl.pallas_call(
        _upsample_kernel,
        out_shape=jax.ShapeDtypeStruct((N, H, 2, W, 2 * Cp), dtype),
        grid_spec=pltpu.PrefetchScalarGridSpec(
            num_scalar_prefetch=0,
            grid=(N,),
            in_specs=[
                pl.BlockSpec((1, H + 2, W + 2, Cp), lambda n: (n, 0, 0, 0)),
                pl.BlockSpec((2, 2, 4, Cp, Cp), lambda n: (0, 0, 0, 0, 0)),
                pl.BlockSpec((1, Cp), lambda n: (0, 0)),
            ],
            out_specs=pl.BlockSpec((1, H, 2, W, 2 * Cp),
                                   lambda n: (n, 0, 0, 0, 0)),
        ),
        compiler_params=pltpu.CompilerParams(
            dimension_semantics=("parallel",),              # batch is independent
            vmem_limit_bytes=32 * 1024 * 1024),
        cost_estimate=pl.CostEstimate(flops=flops, transcendentals=0,
                                      bytes_accessed=bytes_accessed),
    )(x, wp, b)

    out = out.reshape(N, H, 2, W, 2, Cp)
    if pc:
        out = out[..., :C]
    # (N, H, 2, W, 2, C) -> (N, 2H, 2W, C): contiguous merge, zero-cost reshape.
    return out.reshape(N, 2 * H, 2 * W, C)


def upsample_forward(x_nchw, weight, bias):
    """PyTorch-layout wrapper (NCHW in / out); the kernel itself is NHWC."""
    x = jnp.transpose(x_nchw, (0, 2, 3, 1))
    y = upsample_forward_nhwc(x, weight, bias)
    return jnp.transpose(y, (0, 3, 1, 2))


def _reference_conv_transpose(x, weight, bias):
    # pure-JAX reference for ConvTranspose2d(k=4, s=2, p=1) in NCHW
    w_flip = jnp.flip(weight, axis=(2, 3))
    w_oihw = jnp.transpose(w_flip, (1, 0, 2, 3))
    out = jax.lax.conv_general_dilated(
        x, w_oihw,
        window_strides=(1, 1),
        padding=[(2, 2), (2, 2)],
        lhs_dilation=(2, 2),
        dimension_numbers=("NCHW", "OIHW", "NCHW"),
        precision=jax.lax.Precision.HIGHEST)
    return out + bias[None, :, None, None]


if __name__ == "__main__":
    key = jax.random.PRNGKey(0)
    k1, k2, k3, k4 = jax.random.split(key, 4)

    # ---- Residual (the spec'd module): fn(x) + x ---------------------------
    N, C, H, W = 2, 4, 16, 16
    x = jax.random.normal(k1, (N, C, H, W), dtype=jnp.float32)
    fn = lambda t: jnp.tanh(t)          # stand-in for the wrapped sub-module
    res = Residual(fn)
    y = jax.block_until_ready(res(x))
    assert y.shape == x.shape, y.shape
    y_ref = jnp.tanh(x) + x
    np.testing.assert_allclose(np.asarray(y), np.asarray(y_ref),
                               atol=1e-6, rtol=1e-6)

    # ---- Upsample kernel carried over from the previous round --------------
    Nu, Cu, Hu, Wu = 2, 4, 8, 8
    xu = jax.random.normal(k2, (Nu, Cu, Hu, Wu), dtype=jnp.float32)
    wt = jax.random.normal(k3, (Cu, Cu, 4, 4), dtype=jnp.float32) * 0.1
    bs = jax.random.normal(k4, (Cu,), dtype=jnp.float32) * 0.1
    yu = jax.block_until_ready(upsample_forward(xu, wt, bs))
    assert yu.shape == (Nu, Cu, 2 * Hu, 2 * Wu), yu.shape
    # The MXU runs in bf16 (f32 accumulation): compare against an f32 reference
    # evaluated on bf16-rounded operands so tolerances stay tight.
    xu_r = xu.astype(jnp.bfloat16).astype(jnp.float32)
    wt_r = wt.astype(jnp.bfloat16).astype(jnp.float32)
    yu_ref = _reference_conv_transpose(xu_r, wt_r, bs)
    np.testing.assert_allclose(np.asarray(yu), np.asarray(yu_ref),
                               atol=5e-3, rtol=5e-3)

    print("KERNEL_OK")
</pallas_src>

<mosaic_0001>
module attributes {stable_mosaic.version = 11 : i64} {
  func.func @_residual_add_kernel(%arg0: i32, %arg1: memref<8x128xf32, #tpu.memory_space<vmem>>, %arg2: memref<8x128xf32, #tpu.memory_space<vmem>>, %arg3: memref<8x128xf32, #tpu.memory_space<vmem>>) attributes {dimension_semantics = [#tpu.dimension_semantics<parallel>], iteration_bounds = array<i64: 2>, scalar_prefetch = 0 : i64, scratch_operands = 0 : i64, tpu.core_type = #tpu.core_type<tc>, window_params = [{transform_indices = @transform_0, window_bounds = array<i64: 8, 128>}, {transform_indices = @transform_1, window_bounds = array<i64: 8, 128>}, {transform_indices = @transform_2, window_bounds = array<i64: 8, 128>}]} {
    %c0 = arith.constant 0 : index
    %c0_0 = arith.constant 0 : index
    %0 = vector.load %arg1[%c0, %c0_0] : memref<8x128xf32, #tpu.memory_space<vmem>>, vector<8x128xf32>
    %c0_1 = arith.constant 0 : index
    %c0_2 = arith.constant 0 : index
    %1 = vector.load %arg2[%c0_1, %c0_2] : memref<8x128xf32, #tpu.memory_space<vmem>>, vector<8x128xf32>
    %2 = arith.addf %0, %1 : vector<8x128xf32>
    %c0_3 = arith.constant 0 : index
    %c0_4 = arith.constant 0 : index
    %3 = vector.load %arg3[%c0_3, %c0_4] : memref<8x128xf32, #tpu.memory_space<vmem>>, vector<8x128xf32>
    tpu.vector_store %arg3[%c0_3, %c0_4], %2 {strides = array<i32>} : memref<8x128xf32, #tpu.memory_space<vmem>>, vector<8x128xf32>,
    return
  }
  func.func @transform_0(%arg0: i32) -> (i32, i32) {
    %c0_i32 = arith.constant 0 : i32
    %c0_i32_0 = arith.constant 0 : i32
    return %arg0, %c0_i32 : i32, i32
  }
  func.func @transform_1(%arg0: i32) -> (i32, i32) {
    %c0_i32 = arith.constant 0 : i32
    %c0_i32_0 = arith.constant 0 : i32
    return %arg0, %c0_i32 : i32, i32
  }
  func.func @transform_2(%arg0: i32) -> (i32, i32) {
    %c0_i32 = arith.constant 0 : i32
    %c0_i32_0 = arith.constant 0 : i32
    return %arg0, %c0_i32 : i32, i32
  }
}

</mosaic_0001>

<llo_original>
// kernel: tpu_custom_call.1
$region0: #{tpu_custom_call.1}
  #allocation0 [shape = 'u32[]', space=smem, size = 0x4, offset = 0x4, fixed_abs, tag = 'smem constant byte address 0x4 - core index']
  #allocation1 [shape = 'u32[72,128]{1,0:T(1,128)}', space=vmem, size = 0x9000, scoped, tag = 'internal scratch']
  %s0 = inlined_call_operand.hbm [shape: f32[16,128], index: 0, kind: input, shape index: {}]
  %s1 = inlined_call_operand.hbm [shape: f32[16,128], index: 1, kind: input, shape index: {}]
  %s2 = inlined_call_operand.hbm [shape: f32[16,128], index: 2, kind: output, shape index: {}]
  %s3 = sld [smem:[#allocation0]]
  $region49: #{tpu_custom_call.1} parent=0
    _
  %s5 = ssub.s32 1, %s3
  %s6 = scalar_select 0, %s5, %s3
  $region1: #{tpu_custom_call.1} parent=0
    #allocation2 [shape = 'u8[8192]{0}', space=vmem, size = 0x2000, scoped, tag = 'input window, operand 0']
    #allocation3 [shape = 's32[2]{0}', space=sflag, size = 0x8, scoped, tag = 'scoped memory for tpu_custom_call.1']
    #allocation4 [shape = 's32[2]{0}', space=sflag, size = 0x8, scoped, tag = 'scoped memory for tpu_custom_call.1']
    #allocation5 [shape = 'u8[8192]{0}', space=vmem, size = 0x2000, scoped, tag = 'input window, operand 1']
    #allocation6 [shape = 's32[2]{0}', space=sflag, size = 0x8, scoped, tag = 'scoped memory for tpu_custom_call.1']
    #allocation7 [shape = 'u8[8192]{0}', space=vmem, size = 0x2000, scoped, tag = 'output window, operand 0']
    %7 = vsyncpa [#allocation3], 0
    %s8 = scalar_lea.sflag [#allocation3], 1
    %9 = vsyncpa %s8, 0
    %10 = vsyncpa [#allocation6], 0
    %s11 = scalar_lea.sflag [#allocation6], 1
    %12 = vsyncpa %s11, 0
    %13 = vsyncpa [#allocation4], 0
    %s14 = scalar_lea.sflag [#allocation4], 1
    %15 = vsyncpa %s14, 0
    loop: start=0, step=1, limit=4
    $region2: #{tpu_custom_call.1} parent=1 // loop_pre_header
      _
    $region3: #{tpu_custom_call.1} parent=1 // loop_header
      %s17 = sphi 0, %s21
      %p18 = scmp.ge.s32.totalorder %s17, 4
      %s27 = sphi 0, %s29
      %s30 = sphi 0, %s27
      %s31 = sphi 0, %s30
      %s47 = sphi 0, %s31
      %s53 = sphi 0, %s55
      %s56 = sphi 0, %s53
      %s57 = sphi 0, %s56
      %s73 = sphi 0, %s57
      %s79 = sphi 0, %s81
      %s82 = sphi 0, %s79
      %s83 = sphi 0, %s82
      %s99 = sphi 0, %s83
    $region4: #{tpu_custom_call.1} parent=1 // loop_header_branch
      %20 = sbr.rel (%p18) target = $region8
    $region5: #{tpu_custom_call.1} parent=1 // loop_body
      %s22 = ssub.s32 %s17, 1
      %s23 = ssub.s32 %s17, 2
      %s24 = sadd.s32 %s17, 1
      %s25 = ssub.s32 %s17, %s24
      %p26 = scmp.eq.s32.totalorder %s25, 0
      %s28 = sadd.s32 %s27, 1
      %s29 = scalar_select %p26, %s27, %s28
      %p32 = pneg %p26
      %p33 = scmp.eq.s32.totalorder %s17, 1
      %p34 = por %p32, %p33
      %p35 = scmp.ne.s32.totalorder %s27, %s30
      %p36 = scmp.eq.s32.totalorder %s17, 0
      %p37 = por %p35, %p36
      %p38 = scmp.ne.s32.totalorder %s27, %s30
      %p39 = scmp.eq.s32.totalorder %s22, 1
      %p40 = por %p38, %p39
      %p41 = scmp.ne.s32.totalorder %s30, %s31
      %p42 = scmp.eq.s32.totalorder %s22, 0
      %p43 = por %p41, %p42
      %p44 = scmp.ne.s32.totalorder %s30, %s31
      %p45 = scmp.eq.s32.totalorder %s23, 1
      %p46 = por %p44, %p45
      %p48 = scmp.ne.s32.totalorder %s31, %s47
      %p49 = scmp.eq.s32.totalorder %s23, 0
      %p50 = por %p48, %p49
      %s51 = ssub.s32 %s17, %s24
      %p52 = scmp.eq.s32.totalorder %s51, 0
      %s54 = sadd.s32 %s53, 1
      %s55 = scalar_select %p52, %s53, %s54
      %p58 = pneg %p52
      %p59 = scmp.eq.s32.totalorder %s17, 1
      %p60 = por %p58, %p59
      %p61 = scmp.ne.s32.totalorder %s53, %s56
      %p62 = scmp.eq.s32.totalorder %s17, 0
      %p63 = por %p61, %p62
      %p64 = scmp.ne.s32.totalorder %s53, %s56
      %p65 = scmp.eq.s32.totalorder %s22, 1
      %p66 = por %p64, %p65
      %p67 = scmp.ne.s32.totalorder %s56, %s57
      %p68 = scmp.eq.s32.totalorder %s22, 0
      %p69 = por %p67, %p68
      %p70 = scmp.ne.s32.totalorder %s56, %s57
      %p71 = scmp.eq.s32.totalorder %s23, 1
      %p72 = por %p70, %p71
      %p74 = scmp.ne.s32.totalorder %s57, %s73
      %p75 = scmp.eq.s32.totalorder %s23, 0
      %p76 = por %p74, %p75
      %s77 = ssub.s32 %s17, %s24
      %p78 = scmp.eq.s32.totalorder %s77, 0
      %s80 = sadd.s32 %s79, 1
      %s81 = scalar_select %p78, %s79, %s80
      %p84 = pneg %p78
      %p85 = scmp.eq.s32.totalorder %s17, 1
      %p86 = por %p84, %p85
      %p87 = scmp.ne.s32.totalorder %s79, %s82
      %p88 = scmp.eq.s32.totalorder %s17, 0
      %p89 = por %p87, %p88
      %p90 = scmp.ne.s32.totalorder %s79, %s82
      %p91 = scmp.eq.s32.totalorder %s22, 1
      %p92 = por %p90, %p91
      %p93 = scmp.ne.s32.totalorder %s82, %s83
      %p94 = scmp.eq.s32.totalorder %s22, 0
      %p95 = por %p93, %p94
      %p96 = scmp.ne.s32.totalorder %s82, %s83
      %p97 = scmp.eq.s32.totalorder %s23, 1
      %p98 = por %p96, %p97
      %p100 = scmp.ne.s32.totalorder %s83, %s99
      %p101 = scmp.eq.s32.totalorder %s23, 0
      %p102 = por %p100, %p101
      %p103 = scmp.le.s32.totalorder 1, %s17
      %p104 = scmp.lt.s32.totalorder %s17, 3
      %p105 = pnand %p103, %p104
      %p106 = pneg %p105
      // Predicated region
      $region9: #{tpu_custom_call.1} parent=5 // pred_check
        _
      $region10: #{tpu_custom_call.1} parent=5 // pred_check_branch
        %108 = sbr.rel (%p105) target = $region12
      $region11: #{tpu_custom_call.1} parent=5 // pred_region
        %s109 = ssub.s32 %s17, 1
      $region12: #{tpu_custom_call.1} parent=5 // pred_fallthru
        _
      %p110 = scmp.lt.s32.totalorder %s17, 2
      // Predicated region
      $region13: #{tpu_custom_call.1} parent=5 // pred_check
        %p111 = pneg %p110
      $region14: #{tpu_custom_call.1} parent=5 // pred_check_branch
        %113 = sbr.rel (%p111) target = $region16
      $region15: #{tpu_custom_call.1} parent=5 // pred_region
        // Predicated region
        $region17: #{tpu_custom_call.1} parent=15 // pred_check
          %p114 = pneg %p37
        $region18: #{tpu_custom_call.1} parent=15 // pred_check_branch
          %116 = sbr.rel (%p114) target = $region20
        $region19: #{tpu_custom_call.1} parent=15 // pred_region
          %s117 = sand.u32 %s27, 1
          %s118 = scalar_lea.sflag [#allocation3], %s117
          %s119 = sand.u32 %s27, 1
          %s120 = smul.addr %s119, 8
          %s121 = scalar_lea.vmem [#allocation2], %s120
          %123 = vsyncadd %s118, 0
          %s124 = smul.addr %s17, 8
          %s125 = scalar_lea.hbm %s0, %s124
          %s127 = sshll.u32 %s125, 4
          %s128 = int_to_ptr.hbm [resolvable:$true] %s127
          %s129 = sshll.u32 %s121, 4
          %s130 = int_to_ptr.vmem [resolvable:$true] %s129
          %132 = dma.hbm_to_vmem [thread:$0]  %s128, 128, %s130, %s118
        $region20: #{tpu_custom_call.1} parent=15 // pred_fallthru
          _
        // Predicated region
        $region21: #{tpu_custom_call.1} parent=15 // pred_check
          %p133 = pneg %p63
        $region22: #{tpu_custom_call.1} parent=15 // pred_check_branch
          %135 = sbr.rel (%p133) target = $region24
        $region23: #{tpu_custom_call.1} parent=15 // pred_region
          %s136 = sand.u32 %s53, 1
          %s137 = scalar_lea.sflag [#allocation6], %s136
          %s138 = sand.u32 %s53, 1
          %s139 = smul.addr %s138, 8
          %s140 = scalar_lea.vmem [#allocation5], %s139
          %142 = vsyncadd %s137, 0
          %s143 = smul.addr %s17, 8
          %s144 = scalar_lea.hbm %s1, %s143
          %s146 = sshll.u32 %s144, 4
          %s147 = int_to_ptr.hbm [resolvable:$true] %s146
          %s148 = sshll.u32 %s140, 4
          %s149 = int_to_ptr.vmem [resolvable:$true] %s148
          %151 = dma.hbm_to_vmem [thread:$0]  %s147, 128, %s149, %s137
        $region24: #{tpu_custom_call.1} parent=15 // pred_fallthru
          _
      $region16: #{tpu_custom_call.1} parent=5 // pred_fallthru
        _
      %p152 = scmp.le.s32.totalorder 1, %s17
      %p153 = scmp.lt.s32.totalorder %s17, 3
      %p154 = pnand %p152, %p153
      %p155 = pneg %p154
      // Predicated region
      $region25: #{tpu_custom_call.1} parent=5 // pred_check
        _
      $region26: #{tpu_custom_call.1} parent=5 // pred_check_branch
        %157 = sbr.rel (%p154) target = $region28
      $region27: #{tpu_custom_call.1} parent=5 // pred_region
        %s158 = ssub.s32 %s17, 1
        %s159 = sand.u32 %s30, 1
        %s160 = scalar_lea.sflag [#allocation3], %s159
        %s161 = sand.u32 %s30, 1
        %s162 = smul.addr %s161, 8
        %s163 = scalar_lea.vmem [#allocation2], %s162
        // Predicated region
        $region29: #{tpu_custom_call.1} parent=27 // pred_check
          %p164 = pneg %p43
        $region30: #{tpu_custom_call.1} parent=27 // pred_check_branch
          %166 = sbr.rel (%p164) target = $region32
        $region31: #{tpu_custom_call.1} parent=27 // pred_region
          %168 = dma.done %s160, 128
        $region32: #{tpu_custom_call.1} parent=27 // pred_fallthru
          _
        %s169 = sand.u32 %s56, 1
        %s170 = scalar_lea.sflag [#allocation6], %s169
        %s171 = sand.u32 %s56, 1
        %s172 = smul.addr %s171, 8
        %s173 = scalar_lea.vmem [#allocation5], %s172
        // Predicated region
        $region33: #{tpu_custom_call.1} parent=27 // pred_check
          %p174 = pneg %p69
        $region34: #{tpu_custom_call.1} parent=27 // pred_check_branch
          %176 = sbr.rel (%p174) target = $region36
        $region35: #{tpu_custom_call.1} parent=27 // pred_region
          %178 = dma.done %s170, 128
        $region36: #{tpu_custom_call.1} parent=27 // pred_fallthru
          _
        %s179 = sand.u32 %s30, 1
        %s180 = scalar_lea.sflag [#allocation3], %s179
        %s181 = sand.u32 %s30, 1
        %s182 = smul.addr %s181, 8
        %s183 = scalar_lea.vmem [#allocation2], %s182
        %p184 = pneg %p43
        %p185 = pneg %p40
        %s186 = sand.u32 %s56, 1
        %s187 = scalar_lea.sflag [#allocation6], %s186
        %s188 = sand.u32 %s56, 1
        %s189 = smul.addr %s188, 8
        %s190 = scalar_lea.vmem [#allocation5], %s189
        %p191 = pneg %p69
        %p192 = pneg %p66
        %p193 = pneg %p95
        %p194 = pneg %p92
        %s195 = sand.u32 %s82, 1
        %s196 = scalar_lea.sflag [#allocation4], %s195
        %s197 = sand.u32 %s82, 1
        %s198 = smul.addr %s197, 8
        %s199 = scalar_lea.vmem [#allocation7], %s198
        %v200 = vld [vmem:[%s163] sm:$0xff]
        %v201 = vld [vmem:[%s173] sm:$0xff]
        %v202 = vadd.f32 %v200, %v201
        %203 = vst [vmem:[%s199] sm:$0xff] %v202
        %s204 = sand.u32 %s82, 1
        %s205 = scalar_lea.sflag [#allocation4], %s204
        %s206 = sand.u32 %s82, 1
        %s207 = smul.addr %s206, 8
        %s208 = scalar_lea.vmem [#allocation7], %s207
        // Predicated region
        $region37: #{tpu_custom_call.1} parent=27 // pred_check
          %p209 = pneg %p92
        $region38: #{tpu_custom_call.1} parent=27 // pred_check_branch
          %211 = sbr.rel (%p209) target = $region40
        $region39: #{tpu_custom_call.1} parent=27 // pred_region
          %213 = vsyncadd %s205, 0
          %s214 = smul.addr %s22, 8
          %s215 = scalar_lea.hbm %s2, %s214
          %s217 = sshll.u32 %s208, 4
          %s218 = int_to_ptr.vmem [resolvable:$true] %s217
          %s219 = sshll.u32 %s215, 4
          %s220 = int_to_ptr.hbm [resolvable:$true] %s219
          %222 = dma.vmem_to_hbm [thread:$0]  %s218, 128, %s220, %s205
        $region40: #{tpu_custom_call.1} parent=27 // pred_fallthru
          _
      $region28: #{tpu_custom_call.1} parent=5 // pred_fallthru
        _
      %p223 = scmp.le.s32.totalorder 2, %s17
      // Predicated region
      $region41: #{tpu_custom_call.1} parent=5 // pred_check
        %p224 = pneg %p223
      $region42: #{tpu_custom_call.1} parent=5 // pred_check_branch
        %226 = sbr.rel (%p224) target = $region44
      $region43: #{tpu_custom_call.1} parent=5 // pred_region
        %s227 = ssub.s32 %s17, 2
        // Predicated region
        $region45: #{tpu_custom_call.1} parent=43 // pred_check
          %p228 = pneg %p98
        $region46: #{tpu_custom_call.1} parent=43 // pred_check_branch
          %230 = sbr.rel (%p228) target = $region48
        $region47: #{tpu_custom_call.1} parent=43 // pred_region
          %s231 = sand.u32 %s83, 1
          %s232 = scalar_lea.sflag [#allocation4], %s231
          %s233 = sand.u32 %s83, 1
          %s234 = smul.addr %s233, 8
          %s235 = scalar_lea.vmem [#allocation7], %s234
          %237 = dma.done %s232, 128
        $region48: #{tpu_custom_call.1} parent=43 // pred_fallthru
          _
      $region44: #{tpu_custom_call.1} parent=5 // pred_fallthru
        _
    $region6: #{tpu_custom_call.1} parent=1 // loop_footer
      %s21 = sadd.s32 1, %s17
    $region7: #{tpu_custom_call.1} parent=1 // loop_footer_branch
      %16 = sbr.rel target = $region3
    $region8: #{tpu_custom_call.1} parent=1 // loop_exit
      _
    %238 = vsyncpa [#allocation3], 1
    %s239 = scalar_lea.sflag [#allocation3], 1
    %240 = vsyncpa %s239, 1
    %241 = vsyncpa [#allocation6], 1
    %s242 = scalar_lea.sflag [#allocation6], 1
    %243 = vsyncpa %s242, 1
    %244 = vsyncpa [#allocation4], 1
    %s245 = scalar_lea.sflag [#allocation4], 1
    %246 = vsyncpa %s245, 1

</llo_original>
